<compile_context>
chip_gen: v6e
topology: v6e:2x2x1
jax: 0.10.0
libtpu: 0.0.40
codegen_flags: <defaults>
</compile_context>

<pallas_src>
import functools

import jax
import jax.numpy as jnp
from jax import lax
from jax.experimental import pallas as pl
from jax.experimental.pallas import tpu as pltpu


def _chip_config():
    """(n_parallel_cores, per-input tile byte target) for the local TPU."""
    kind = ""
    try:
        kind = jax.devices()[0].device_kind.lower()
    except Exception:
        pass
    if "v7" in kind or "7x" in kind:
        return 2, 4 * 1024 * 1024          # 2 TensorCores, 64 MiB VMEM per TC
    if "v5 lite" in kind or "v5e" in kind or "v5lite" in kind:
        return 1, 2 * 1024 * 1024          # modest tiles on v5e
    return 1, 4 * 1024 * 1024              # v6e & default


def _as_2d(x):
    """Metadata-only reshape to a 2-D view; no padding, no extra HBM pass."""
    n = x.size
    if n % 128 == 0:
        for lanes in (512, 256, 128):
            if n % lanes == 0:
                return x.reshape(n // lanes, lanes)     # lane-dense flat view
    if x.ndim >= 2:
        return x.reshape(-1, x.shape[-1])               # keep full last dim
    return x.reshape(1, n)


def _bce_with_logits_kernel(p_ref, t_ref, out_ref, acc_ref, *,
                            tb, width, rows, acc_rows, may_need_mask):
    c = pl.program_id(0)            # core / parallel index
    s = pl.program_id(1)            # reduction step
    n_steps = pl.num_programs(1)

    @pl.when(s == 0)
    def _init():
        acc_ref[...] = jnp.zeros_like(acc_ref)

    # Upcast after load: bf16/int8 inputs are fine, compute stays f32.
    x = p_ref[...].astype(jnp.float32)
    t = t_ref[...].astype(jnp.float32)
    # target == -1 sentinel -> 0.  Valid BCE targets are >= 0, so max == select.
    t = jnp.maximum(t, 0.0)

    # Numerically stable BCE-with-logits (same formula torch uses):
    #   loss = max(x, 0) - x*t + log1p(exp(-|x|))
    loss = jnp.maximum(x, 0.0) - x * t + jnp.log1p(jnp.exp(-jnp.abs(x)))

    def _fold(v):
        # (tb, width) -> (acc_rows, width): cross-vreg VALU adds only.
        if tb == acc_rows:
            return v
        return v.reshape(tb // acc_rows, acc_rows, width).sum(axis=0)

    if may_need_mask:
        block_row0 = (c * n_steps + s) * tb
        needs_mask = block_row0 + tb > rows

        @pl.when(needs_mask)
        def _tail():
            rid = lax.broadcasted_iota(jnp.int32, (tb, width), 0)
            masked = jnp.where(rid < rows - block_row0, loss, 0.0)
            acc_ref[...] += _fold(masked)

        @pl.when(jnp.logical_not(needs_mask))
        def _interior():
            acc_ref[...] += _fold(loss)
    else:
        acc_ref[...] += _fold(loss)

    # Single small XLU reduce + lane-dense store, once per core.
    @pl.when(s == n_steps - 1)
    def _finalize():
        partial = jnp.sum(acc_ref[...])
        out_ref[...] = jnp.full((1, 8, 128), partial, dtype=jnp.float32)


def _bce_loss(predict: jax.Array, target: jax.Array) -> jax.Array:
    assert predict.shape == target.shape, (
        "predict & target shape do not match\n"
        + str(predict.shape) + "\n" + str(target.shape)
    )
    n = int(predict.size)  # static (shape-derived) valid element count
    n_par, tile_bytes_target = _chip_config()

    p2 = _as_2d(predict)
    t2 = _as_2d(target)
    rows, width = p2.shape

    itemsize = max(p2.dtype.itemsize, t2.dtype.itemsize)
    row_bytes = width * itemsize
    # TODO(synk): a single row-tile is assumed to fit in VMEM; extremely wide
    # rows (width * 4B >> 4 MiB) would additionally need lane-dimension tiling.
    if rows >= 8:
        tb = max(8, min((tile_bytes_target // row_bytes) // 8 * 8,
                        (rows // 8) * 8))
    else:
        tb = rows                              # block dim == full array dim

    num_blocks = pl.cdiv(rows, tb)
    steps = pl.cdiv(num_blocks, n_par)
    last_block = num_blocks - 1
    may_need_mask = n_par * steps * tb > rows   # static: any partial/dup block?
    acc_rows = 8 if tb % 8 == 0 else tb

    kernel = functools.partial(
        _bce_with_logits_kernel,
        tb=tb, width=width, rows=rows, acc_rows=acc_rows,
        may_need_mask=may_need_mask)

    in_bytes = n * (p2.dtype.itemsize + t2.dtype.itemsize)
    tile_in_bytes = tb * width * (p2.dtype.itemsize + t2.dtype.itemsize)
    # 2 inputs x 2 buffers x tile + scratch, capped at 48 MiB (safe on v7x's
    # 64 MiB physical VMEM as well as v5e/v6e's 128 MiB).
    vmem_limit = int(min(48 * 1024 * 1024,
                         max(32 * 1024 * 1024,
                             int(2.5 * tile_in_bytes) + (4 << 20))))

    def in_map(c, s):
        # Clamp so core-rounding never produces a fully out-of-range block;
        # the duplicate block is fully masked in-kernel.
        return (jnp.minimum(c * steps + s, last_block), 0)

    partials = pl.pallas_call(
        kernel,
        out_shape=jax.ShapeDtypeStruct((n_par, 8, 128), jnp.float32),
        grid_spec=pltpu.PrefetchScalarGridSpec(
            num_scalar_prefetch=0,
            grid=(n_par, steps),
            in_specs=[
                pl.BlockSpec((tb, width), in_map),
                pl.BlockSpec((tb, width), in_map),
            ],
            out_specs=pl.BlockSpec((1, 8, 128), lambda c, s: (c, 0, 0)),
            scratch_shapes=[pltpu.VMEM((acc_rows, width), jnp.float32)],
        ),
        compiler_params=pltpu.CompilerParams(
            dimension_semantics=("parallel", "arbitrary"),
            vmem_limit_bytes=vmem_limit),
        cost_estimate=pl.CostEstimate(
            flops=8 * n, transcendentals=2 * n, bytes_accessed=in_bytes),
    )(p2, t2)

    # Sum per-core partials and apply the mean in the wrapper.
    return jnp.sum(partials[:, 0, 0]) / jnp.float32(n)


bce_loss = jax.jit(_bce_loss)


if __name__ == "__main__":
    key = jax.random.PRNGKey(0)
    keys = jax.random.split(key, 8)

    def reference(predict, target):
        x = predict.astype(jnp.float32)
        t = jnp.maximum(target.astype(jnp.float32), 0.0)
        return jnp.mean(
            jnp.maximum(x, 0.0) - x * t + jnp.log1p(jnp.exp(-jnp.abs(x))))

    def check(predict, target, atol=1e-5):
        out = bce_loss(predict, target)
        jax.block_until_ready(out)
        ref = reference(predict, target)
        assert jnp.allclose(out, ref, atol=atol, rtol=1e-4), (out, ref)

    # Small VQA-like shape: [batch, num_answers] with targets in {-1, 0, 1}.
    p1 = jax.random.normal(keys[0], (2, 32), dtype=jnp.float32)
    t1 = jax.random.randint(keys[1], (2, 32), -1, 2).astype(jnp.float32)
    check(p1, t1)

    # Exercises the multi-step grid plus the gated partial-tail row mask.
    p2 = jax.random.normal(keys[2], (44, 600), dtype=jnp.float32)
    t2 = jax.random.randint(keys[3], (44, 600), -1, 2).astype(jnp.float32)
    check(p2, t2)

    # n % 512 == 0 -> lane-dense flat-view path.
    p3 = jax.random.normal(keys[4], (16, 256), dtype=jnp.float32)
    t3 = jax.random.randint(keys[5], (16, 256), -1, 2).astype(jnp.float32)
    check(p3, t3)

    # Realistic VQA width (non-multiple of 128); bf16 logits + int8 targets are
    # accepted directly (bandwidth win), compute stays f32 in-kernel.
    p4 = jax.random.normal(keys[6], (64, 3129), dtype=jnp.bfloat16)
    t4 = jax.random.randint(keys[7], (64, 3129), -1, 2).astype(jnp.int8)
    check(p4, t4, atol=1e-4)

    print("KERNEL_OK")
</pallas_src>

<mosaic_0001>
module attributes {stable_mosaic.version = 11 : i64} {
  func.func @_bce_with_logits_kernel(%arg0: i32, %arg1: i32, %arg2: memref<2x32xf32, #tpu.memory_space<vmem>>, %arg3: memref<2x32xf32, #tpu.memory_space<vmem>>, %arg4: memref<1x8x128xf32, #tpu.memory_space<vmem>>, %arg5: memref<2x32xf32, #tpu.memory_space<vmem>>) attributes {dimension_semantics = [#tpu.dimension_semantics<parallel>, #tpu.dimension_semantics<arbitrary>], iteration_bounds = array<i64: 1, 1>, scalar_prefetch = 0 : i64, scratch_operands = 1 : i64, tpu.core_type = #tpu.core_type<tc>, window_params = [{transform_indices = @transform_0, window_bounds = array<i64: 2, 32>}, {transform_indices = @transform_1, window_bounds = array<i64: 2, 32>}, {transform_indices = @transform_2, window_bounds = array<i64: 1, 8, 128>}]} {
    %c0_i32 = arith.constant 0 : i32
    %0 = arith.cmpi eq, %arg1, %c0_i32 : i32
    %1 = arith.extui %0 : i1 to i32
    %c0_i32_0 = arith.constant 0 : i32
    %2 = arith.cmpi ne, %1, %c0_i32_0 : i32
    scf.if %2 {
      %cst_12 = arith.constant 0.000000e+00 : f32
      %23 = vector.broadcast %cst_12 : f32 to vector<2x32xf32>
      %c0_13 = arith.constant 0 : index
      %c0_14 = arith.constant 0 : index
      %24 = vector.load %arg5[%c0_13, %c0_14] : memref<2x32xf32, #tpu.memory_space<vmem>>, vector<2x32xf32>
      tpu.vector_store %arg5[%c0_13, %c0_14], %23 {strides = array<i32>} : memref<2x32xf32, #tpu.memory_space<vmem>>, vector<2x32xf32>,
    } else {
    }
    %c0 = arith.constant 0 : index
    %c0_1 = arith.constant 0 : index
    %3 = vector.load %arg2[%c0, %c0_1] : memref<2x32xf32, #tpu.memory_space<vmem>>, vector<2x32xf32>
    %c0_2 = arith.constant 0 : index
    %c0_3 = arith.constant 0 : index
    %4 = vector.load %arg3[%c0_2, %c0_3] : memref<2x32xf32, #tpu.memory_space<vmem>>, vector<2x32xf32>
    %cst = arith.constant 0.000000e+00 : f32
    %5 = vector.broadcast %cst : f32 to vector<2x32xf32>
    %6 = arith.maximumf %4, %5 : vector<2x32xf32>
    %cst_4 = arith.constant 0.000000e+00 : f32
    %7 = vector.broadcast %cst_4 : f32 to vector<2x32xf32>
    %8 = arith.maximumf %3, %7 : vector<2x32xf32>
    %9 = arith.mulf %3, %6 : vector<2x32xf32>
    %10 = arith.subf %8, %9 : vector<2x32xf32>
    %11 = math.absf %3 : vector<2x32xf32>
    %cst_5 = arith.constant 0.000000e+00 : f32
    %12 = vector.broadcast %cst_5 : f32 to vector<2x32xf32>
    %13 = arith.subf %12, %11 : vector<2x32xf32>
    %14 = math.exp %13 : vector<2x32xf32>
    %15 = math.log1p %14 : vector<2x32xf32>
    %16 = arith.addf %10, %15 : vector<2x32xf32>
    %c0_6 = arith.constant 0 : index
    %c0_7 = arith.constant 0 : index
    %17 = vector.load %arg5[%c0_6, %c0_7] : memref<2x32xf32, #tpu.memory_space<vmem>>, vector<2x32xf32>
    %18 = arith.addf %17, %16 : vector<2x32xf32>
    %c0_8 = arith.constant 0 : index
    %c0_9 = arith.constant 0 : index
    %19 = vector.load %arg5[%c0_8, %c0_9] : memref<2x32xf32, #tpu.memory_space<vmem>>, vector<2x32xf32>
    tpu.vector_store %arg5[%c0_8, %c0_9], %18 {strides = array<i32>} : memref<2x32xf32, #tpu.memory_space<vmem>>, vector<2x32xf32>,
    %c0_i32_10 = arith.constant 0 : i32
    %20 = arith.cmpi eq, %arg1, %c0_i32_10 : i32
    %21 = arith.extui %20 : i1 to i32
    %c0_i32_11 = arith.constant 0 : i32
    %22 = arith.cmpi ne, %21, %c0_i32_11 : i32
    scf.if %22 {
      %c0_12 = arith.constant 0 : index
      %c0_13 = arith.constant 0 : index
      %23 = vector.load %arg5[%c0_12, %c0_13] : memref<2x32xf32, #tpu.memory_space<vmem>>, vector<2x32xf32>
      %24 = vector.shape_cast %23 : vector<2x32xf32> to vector<1x2x32xf32>
      %cst_14 = arith.constant dense<0.000000e+00> : vector<1xf32>
      %25 = vector.multi_reduction <add>, %24, %cst_14 [1, 2] : vector<1x2x32xf32> to vector<1xf32>
      %26 = vector.shape_cast %25 : vector<1xf32> to vector<1x1x1xf32>
      %27 = vector.extract %26[0, 0, 0] : f32 from vector<1x1x1xf32>
      %28 = vector.broadcast %27 : f32 to vector<1x8x128xf32>
      %c0_15 = arith.constant 0 : index
      %c0_16 = arith.constant 0 : index
      %c0_17 = arith.constant 0 : index
      %29 = vector.load %arg4[%c0_15, %c0_16, %c0_17] : memref<1x8x128xf32, #tpu.memory_space<vmem>>, vector<1x8x128xf32>
      tpu.vector_store %arg4[%c0_15, %c0_16, %c0_17], %28 {strides = array<i32>} : memref<1x8x128xf32, #tpu.memory_space<vmem>>, vector<1x8x128xf32>,
    } else {
    }
    return
  }
  func.func @transform_0(%arg0: i32, %arg1: i32) -> (i32, i32) {
    %c1_i32 = arith.constant 1 : i32
    %0 = arith.muli %arg0, %c1_i32 : i32
    %1 = arith.addi %0, %arg1 : i32
    %c0_i32 = arith.constant 0 : i32
    %2 = arith.minsi %1, %c0_i32 : i32
    %c0_i32_0 = arith.constant 0 : i32
    %c0_i32_1 = arith.constant 0 : i32
    return %2, %c0_i32_0 : i32, i32
  }
  func.func @transform_1(%arg0: i32, %arg1: i32) -> (i32, i32) {
    %c1_i32 = arith.constant 1 : i32
    %0 = arith.muli %arg0, %c1_i32 : i32
    %1 = arith.addi %0, %arg1 : i32
    %c0_i32 = arith.constant 0 : i32
    %2 = arith.minsi %1, %c0_i32 : i32
    %c0_i32_0 = arith.constant 0 : i32
    %c0_i32_1 = arith.constant 0 : i32
    return %2, %c0_i32_0 : i32, i32
  }
  func.func @transform_2(%arg0: i32, %arg1: i32) -> (i32, i32, i32) {
    %c0_i32 = arith.constant 0 : i32
    %c0_i32_0 = arith.constant 0 : i32
    %c0_i32_1 = arith.constant 0 : i32
    return %arg0, %c0_i32, %c0_i32_0 : i32, i32, i32
  }
}

</mosaic_0001>

<llo_original>
// kernel: _bce_loss.1
$region0: #{_bce_loss.1}
  #allocation0 [shape = 'u32[]', space=smem, size = 0x4, offset = 0x4, fixed_abs, tag = 'smem constant byte address 0x4 - core index']
  #allocation1 [shape = 'u32[144,128]{1,0:T(1,128)}', space=vmem, size = 0x12000, scoped, tag = 'internal scratch']
  #allocation2 [shape = 'f32[2,32]{1,0:T(2,128)}', space=vmem, size = 0x400, scoped, tag = 'scratch operand']
  %s0 = inlined_call_operand.hbm [shape: f32[2,32], index: 0, kind: input, shape index: {}]
  %s1 = inlined_call_operand.hbm [shape: f32[2,32], index: 1, kind: input, shape index: {}]
  %s2 = inlined_call_operand.vmem [shape: f32[1,8,128], index: 2, kind: output, shape index: {}]
  %s3 = sld [smem:[#allocation0]]
  $region34: #{_bce_loss.1} parent=0
    _
  %s5 = ssub.s32 1, %s3
  %s6 = scalar_select 0, %s5, %s3
  $region1: #{_bce_loss.1} parent=0
    #allocation3 [shape = 'u8[1024]{0}', space=vmem, size = 0x400, scoped, tag = 'input window, operand 0, single buffered']
    #allocation4 [shape = 's32[1]{0}', space=sflag, size = 0x4, scoped, tag = 'scoped memory for _bce_loss.1']
    #allocation5 [shape = 'u8[1024]{0}', space=vmem, size = 0x400, scoped, tag = 'input window, operand 1, single buffered']
    #allocation6 [shape = 's32[1]{0}', space=sflag, size = 0x4, scoped, tag = 'scoped memory for _bce_loss.1']
    %7 = vsyncpa [#allocation4], 0
    %8 = vsyncpa [#allocation6], 0
    // Predicated region
    $region2: #{_bce_loss.1} parent=1 // pred_check
      _
    $region3: #{_bce_loss.1} parent=1 // pred_check_branch
      %10 = sbr.rel (0) target = $region5
    $region4: #{_bce_loss.1} parent=1 // pred_region
      %s11 = sadd.s32 0, 0
      %p12 = scmp.lt.s32.totalorder %s11, 0
      %s13 = scalar_select %p12, %s11, 0
      %s15 = ssub.s32 32, 32
      %16 = vsyncadd [#allocation4], %s15
      %s17 = smul.addr %s13, 32
      %s18 = scalar_lea.hbm %s0, %s17
      %s20 = sshll.u32 [#allocation3], 4
      %s21 = int_to_ptr.vmem [resolvable:$true] %s20
      %23 = dma.hbm_to_vmem [thread:$0]  %s18, 32, %s21, [#allocation4]
    $region5: #{_bce_loss.1} parent=1 // pred_fallthru
      _
    // Predicated region
    $region6: #{_bce_loss.1} parent=1 // pred_check
      _
    $region7: #{_bce_loss.1} parent=1 // pred_check_branch
      %25 = sbr.rel (0) target = $region9
    $region8: #{_bce_loss.1} parent=1 // pred_region
      %s26 = sadd.s32 0, 0
      %p27 = scmp.lt.s32.totalorder %s26, 0
      %s28 = scalar_select %p27, %s26, 0
      %s30 = ssub.s32 32, 32
      %31 = vsyncadd [#allocation6], %s30
      %s32 = smul.addr %s28, 32
      %s33 = scalar_lea.hbm %s1, %s32
      %s35 = sshll.u32 [#allocation5], 4
      %s36 = int_to_ptr.vmem [resolvable:$true] %s35
      %38 = dma.hbm_to_vmem [thread:$0]  %s33, 32, %s36, [#allocation6]
    $region9: #{_bce_loss.1} parent=1 // pred_fallthru
      _
    // Predicated region
    $region10: #{_bce_loss.1} parent=1 // pred_check
      _
    $region11: #{_bce_loss.1} parent=1 // pred_check_branch
      %40 = sbr.rel (0) target = $region13
    $region12: #{_bce_loss.1} parent=1 // pred_region
      %41 = dma.done [#allocation4], 32
    $region13: #{_bce_loss.1} parent=1 // pred_fallthru
      _
    // Predicated region
    $region14: #{_bce_loss.1} parent=1 // pred_check
      _
    $region15: #{_bce_loss.1} parent=1 // pred_check_branch
      %43 = sbr.rel (0) target = $region17
    $region16: #{_bce_loss.1} parent=1 // pred_region
      %44 = dma.done [#allocation6], 32
    $region17: #{_bce_loss.1} parent=1 // pred_fallthru
      _
    %s45 = sadd.s32 0, 0
    %p46 = scmp.lt.s32.totalorder %s45, 0
    %s47 = scalar_select %p46, %s45, 0
    %s48 = sadd.s32 0, 0
    %p49 = scmp.lt.s32.totalorder %s48, 0
    %s50 = scalar_select %p49, %s48, 0
    %p51 = scmp.eq.s32.totalorder 0, 0
    // Predicated region
    $region18: #{_bce_loss.1} parent=1 // pred_check
      %p52 = pneg %p51
    $region19: #{_bce_loss.1} parent=1 // pred_check_branch
      %54 = sbr.rel (%p52) target = $region21
    $region20: #{_bce_loss.1} parent=1 // pred_region
      %vm55 = vcmask 254976
      %56 = vst.msk [vmem:[#allocation2] sm:$0x3] %vm55, 0.0
    $region21: #{_bce_loss.1} parent=1 // pred_fallthru
      _
    %v57 = vld [vmem:[#allocation3] sm:$0x3]
    %v58 = vld [vmem:[#allocation5] sm:$0x3]
    %v59 = vmax.f32 %v58, 0.0
    %v60 = vmax.f32 %v57, 0.0
    %v61 = vmul.f32 %v57, %v59
    %v62 = vsub.f32 %v60, %v61
    %v63 = vand.u32 2147483647, %v57
    %v64 = vsub.f32 0.0, %v63
    %v65 = vmul.f32 %v64, 1.442695
    %v66 = vpow.pop %v65
    %v67 = vadd.f32 %v66, 1.0
    %v68 = vlog2.pop %v67
    %v69 = vmul.f32 %v68, 0.6931472
    %v70 = vmul.f32 -0.5, %v66
    %v71 = vadd.f32 %v70, 1.0
    %v72 = vmul.f32 %v71, %v66
    %v73 = vand.u32 2147483647, %v66
    %vm74 = vcmp.lt.f32.partialorder %v73, 0.0004427343
    %v75 = vsel %vm74, %v72, %v69
    %v76 = vadd.f32 %v62, %v75
    %v77 = vld [vmem:[#allocation2] sm:$0x3]
    %v78 = vadd.f32 %v77, %v76
    %vm79 = vcmask 254976
    %80 = vst.msk [vmem:[#allocation2] sm:$0x3] %vm79, %v78
    // Predicated region
    $region22: #{_bce_loss.1} parent=1 // pred_check
      %p81 = pneg %p51
    $region23: #{_bce_loss.1} parent=1 // pred_check_branch
      %83 = sbr.rel (%p81) target = $region25
    $region24: #{_bce_loss.1} parent=1 // pred_region
      %v84 = vld [vmem:[#allocation2] sm:$0x3]
      %v85 = vsel %vm79, %v84, 0.0
      %86 = vadd.xlane.f32.xlu0 %v85
      %v87 = vpop.xlane.xlu0 %86
      %v88 = vrot.slane %v87, 4
      %v89 = vadd.f32 %v87, %v88
      %v90 = vrot.slane %v89, 2
      %v91 = vadd.f32 %v89, %v90
      %v92 = vrot.slane %v91, 1
      %v93 = vadd.f32 %v91, %v92
      %s94 = vtos %v93
      %v95 = vstv %s94
      %96 = vst [vmem:[%s2] sm:$0xff] %v95
    $region25: #{_bce_loss.1} parent=1 // pred_fallthru
      _
    // Predicated region
    $region26: #{_bce_loss.1} parent=1 // pred_check
      _
    $region27: #{_bce_loss.1} parent=1 // pred_check_branch
      %98 = sbr.rel (0) target = $region29
    $region28: #{_bce_loss.1} parent=1 // pred_region
      _
    $region29: #{_bce_loss.1} parent=1 // pred_fallthru
      _
    // Predicated region
    $region30: #{_bce_loss.1} parent=1 // pred_check
      _
    $region31: #{_bce_loss.1} parent=1 // pred_check_branch
      %100 = sbr.rel (0) target = $region33
    $region32: #{_bce_loss.1} parent=1 // pred_region
      _
    $region33: #{_bce_loss.1} parent=1 // pred_fallthru
      _
    %101 = vsyncpa [#allocation4], 1
    %102 = vsyncpa [#allocation6], 1

</llo_original>
